<compile_context>
chip_gen: v5e
topology: v5e:2x2
jax: 0.10.0
libtpu: 0.0.40
codegen_flags: <defaults>
</compile_context>

<pallas_src>
import jax
import jax.numpy as jnp
from jax import lax
from jax.experimental import pallas as pl
from jax.experimental.pallas import tpu as pltpu


def _cdiv(a, b):
    return -(-a // b)


def _vmem_capacity_bytes():
    """Physical VMEM per core; conservative fallback if the query fails."""
    try:
        info = pltpu.get_tpu_info()
        cap = getattr(info, "vmem_capacity_bytes", None)
        if cap:
            return int(cap)
    except Exception:
        pass
    return 64 << 20  # v7x per-TC size: safe lower bound for budgeting.


# ---------------------------------------------------------------------------
# Fused single-pass kernel: Gram + softmax + apply for one image.
# ---------------------------------------------------------------------------
def _fused_kernel(gamma_ref, x_ref, o_ref):
    gamma = gamma_ref[0]
    xt = x_ref[...]                                   # (C, N), input dtype
    xb = xt.astype(jnp.bfloat16)
    # G = X X^T as a contraction over N on both operands (no transpose copy).
    aff = lax.dot_general(
        xb, xb,
        dimension_numbers=(((1,), (1,)), ((), ())),
        preferred_element_type=jnp.float32,
    )                                                 # (C, C), f32
    # softmax(rowmax(G) - G) stabilized by its own max == exp(rowmin(G) - G)/sum.
    m = jnp.min(aff, axis=-1, keepdims=True)
    e = jnp.exp(m - aff)
    p = (e / jnp.sum(e, axis=-1, keepdims=True)).astype(jnp.bfloat16)
    w = jnp.dot(p, xb, preferred_element_type=jnp.float32)    # (C, N), f32
    o_ref[...] = (gamma * w + xt.astype(jnp.float32)).astype(o_ref.dtype)


# ---------------------------------------------------------------------------
# Two-pass streaming kernels.
# ---------------------------------------------------------------------------
def _make_gram_softmax_kernel(n_total, tn, ragged):
    """Pass 1: accumulate G = X X^T in an f32 scratch, emit bf16 P at the end."""

    def kernel(x_ref, p_ref, acc_ref):
        # x_ref:   (C, tn) tile of X (input dtype)
        # p_ref:   (C, C) bf16 output block, resident across the N axis
        # acc_ref: (C, C) f32 VMEM scratch accumulator
        n = pl.program_id(1)

        @pl.when(n == 0)
        def _():
            acc_ref[...] = jnp.zeros_like(acc_ref)

        xt = x_ref[...]
        if ragged:
            # Final tile may extend past N: zero the out-of-bounds lanes so
            # they do not contaminate the Gram accumulation.
            lane = lax.broadcasted_iota(jnp.int32, xt.shape, 1)
            xt = jnp.where(n * tn + lane < n_total, xt, jnp.zeros_like(xt))
        xb = xt.astype(jnp.bfloat16)
        acc_ref[...] += lax.dot_general(
            xb, xb,
            dimension_numbers=(((1,), (1,)), ((), ())),
            preferred_element_type=jnp.float32,
        )

        @pl.when(n == pl.num_programs(1) - 1)
        def _():
            aff = acc_ref[...]
            m = jnp.min(aff, axis=-1, keepdims=True)
            e = jnp.exp(m - aff)
            p_ref[...] = (e / jnp.sum(e, axis=-1, keepdims=True)).astype(p_ref.dtype)

    return kernel


def _apply_kernel(gamma_ref, p_ref, x_ref, o_ref):
    """Pass 2: out_tile = gamma * (P @ x_tile) + x_tile."""
    gamma = gamma_ref[0]
    xt = x_ref[...]                                   # (C, tn), input dtype
    w = jnp.dot(p_ref[...], xt.astype(jnp.bfloat16),  # P already bf16
                preferred_element_type=jnp.float32)   # (C, tn), f32
    o_ref[...] = (gamma * w + xt.astype(jnp.float32)).astype(o_ref.dtype)


# ---------------------------------------------------------------------------
# Wrapper.
# ---------------------------------------------------------------------------
def channel_attention_block(x, gamma):
    """x: (B, C, H, W); gamma: scalar/(1,) parameter. Returns (B, C, H, W)."""
    B, C, H, W = x.shape
    N = H * W
    x_flat = x.reshape(B, C, N)
    gamma = jnp.asarray(gamma, jnp.float32).reshape((1,))
    itemsize = jnp.dtype(x.dtype).itemsize

    vmem_cap = _vmem_capacity_bytes()
    vmem_limit = min(int(0.70 * vmem_cap), 100 << 20)

    # ---- fused fast path: whole (C, N) slab per image fits the VMEM budget.
    slab = C * N * itemsize
    fused_vmem = (4 * slab          # double-buffered input + output tiles
                  + C * N * 10      # bf16 copy + f32 upcast + f32 weights
                  + C * C * 16)     # Gram / softmax temporaries
    fused_budget = max(8 << 20, int(0.35 * vmem_cap))
    if fused_vmem <= fused_budget:
        out_flat = pl.pallas_call(
            _fused_kernel,
            out_shape=jax.ShapeDtypeStruct((B, C, N), x.dtype),
            grid=(B,),
            in_specs=[
                pl.BlockSpec(memory_space=pltpu.MemorySpace.SMEM),          # gamma
                pl.BlockSpec((pl.Squeezed(), C, N), lambda b: (b, 0, 0)),   # X
            ],
            out_specs=pl.BlockSpec((pl.Squeezed(), C, N), lambda b: (b, 0, 0)),
            compiler_params=pltpu.CompilerParams(
                dimension_semantics=("parallel",),
                vmem_limit_bytes=vmem_limit),
        )(gamma, x_flat)
        return out_flat.reshape(B, C, H, W)

    # ---- streaming two-pass path.
    # Byte-budgeted lane-dense tile: ~4 MiB per (C, tn) tile, multiple of 128.
    tile_budget = 4 << 20
    tn = max(128, (tile_budget // max(1, itemsize * C)) // 128 * 128)
    tn = min(tn, _cdiv(N, 128) * 128)
    nt = _cdiv(N, tn)
    ragged = (N % tn) != 0

    # Pass 1: P = softmax(rowmax(X X^T) - X X^T), (B, C, C) bf16.
    p = pl.pallas_call(
        _make_gram_softmax_kernel(N, tn, ragged),
        out_shape=jax.ShapeDtypeStruct((B, C, C), jnp.bfloat16),
        grid=(B, nt),
        in_specs=[
            pl.BlockSpec((pl.Squeezed(), C, tn), lambda b, n: (b, 0, n)),
        ],
        out_specs=pl.BlockSpec((pl.Squeezed(), C, C), lambda b, n: (b, 0, 0)),
        scratch_shapes=[pltpu.VMEM((C, C), jnp.float32)],
        compiler_params=pltpu.CompilerParams(
            dimension_semantics=("parallel", "arbitrary"),
            vmem_limit_bytes=vmem_limit),
    )(x_flat)
    # TODO(synk): on v7x with B == 1, split the N reduction over an extra
    # "parallel" grid axis (partial Grams + tiny reduce) so both TensorCores
    # stream HBM during pass 1.

    # Pass 2: out = gamma * (P @ X) + X, streamed over N tiles.
    out_flat = pl.pallas_call(
        _apply_kernel,
        out_shape=jax.ShapeDtypeStruct((B, C, N), x.dtype),
        grid=(B, nt),
        in_specs=[
            pl.BlockSpec(memory_space=pltpu.MemorySpace.SMEM),               # gamma
            pl.BlockSpec((pl.Squeezed(), C, C), lambda b, n: (b, 0, 0)),     # P
            pl.BlockSpec((pl.Squeezed(), C, tn), lambda b, n: (b, 0, n)),    # X
        ],
        out_specs=pl.BlockSpec((pl.Squeezed(), C, tn), lambda b, n: (b, 0, n)),
        compiler_params=pltpu.CompilerParams(
            dimension_semantics=("parallel", "parallel"),
            vmem_limit_bytes=vmem_limit),
    )(gamma, p, x_flat)

    return out_flat.reshape(B, C, H, W)


# ---------------------------------------------------------------------------
# References.
# ---------------------------------------------------------------------------
def _reference(x, gamma):
    """Pure-f32 reference, identical math to the PyTorch module."""
    B, C, H, W = x.shape
    q = x.reshape(B, C, -1)
    aff = jnp.matmul(q, jnp.transpose(q, (0, 2, 1)))
    aff_new = jnp.max(aff, axis=-1, keepdims=True) - aff
    p = jax.nn.softmax(aff_new, axis=-1)
    w = jnp.matmul(p, q).reshape(B, C, H, W)
    return gamma[0] * w + x


def _reference_bf16(x, gamma):
    """Reference with the kernel's numerical contract: bf16 matmul operands,
    f32 accumulation, f32 softmax and residual."""
    B, C, H, W = x.shape
    q = x.reshape(B, C, -1).astype(jnp.float32)
    qb = q.astype(jnp.bfloat16)
    aff = jnp.matmul(qb, jnp.transpose(qb, (0, 2, 1)),
                     preferred_element_type=jnp.float32)
    m = jnp.min(aff, axis=-1, keepdims=True)
    e = jnp.exp(m - aff)
    p = (e / jnp.sum(e, axis=-1, keepdims=True)).astype(jnp.bfloat16)
    w = jnp.matmul(p, qb,
                   preferred_element_type=jnp.float32).reshape(B, C, H, W)
    return gamma[0] * w + x


if __name__ == "__main__":
    B, C, H, W = 2, 4, 16, 16
    key = jax.random.PRNGKey(0)
    kx, _ = jax.random.split(key)
    x = jax.random.normal(kx, (B, C, H, W), dtype=jnp.float32)

    # nn.Parameter(torch.zeros(1)) would make the block an identity; use a
    # deterministic nonzero gamma to exercise the full attention path.
    gamma = jnp.array([0.5], dtype=jnp.float32)

    out = channel_attention_block(x, gamma)
    out = jax.block_until_ready(out)
    assert out.shape == (B, C, H, W)

    # Tight check against a reference using the same bf16-operand /
    # f32-accumulate matmul contract as the kernel.
    ref_matched = _reference_bf16(x, gamma)
    assert jnp.allclose(out, ref_matched, atol=3e-2, rtol=3e-2), \
        "mismatch vs bf16-matched reference"

    # Looser sanity check against the full-f32 PyTorch-equivalent reference.
    ref = _reference(x, gamma)
    assert jnp.allclose(out, ref, atol=1e-1, rtol=1e-1), \
        "mismatch vs f32 reference"

    print("KERNEL_OK")
</pallas_src>

<mosaic_0001>
module attributes {stable_mosaic.version = 11 : i64} {
  func.func @_fused_kernel(%arg0: i32, %arg1: memref<1xf32, #tpu.memory_space<smem>>, %arg2: memref<1x4x256xf32, #tpu.memory_space<vmem>>, %arg3: memref<1x4x256xf32, #tpu.memory_space<vmem>>) attributes {dimension_semantics = [#tpu.dimension_semantics<parallel>], iteration_bounds = array<i64: 2>, scalar_prefetch = 0 : i64, scratch_operands = 0 : i64, tpu.core_type = #tpu.core_type<tc>, window_params = [{transform_indices = @transform_0, window_bounds = array<i64: 1>}, {transform_indices = @transform_1, window_bounds = array<i64: 1, 4, 256>}, {transform_indices = @transform_2, window_bounds = array<i64: 1, 4, 256>}]} {
    %c0 = arith.constant 0 : index
    %0 = memref.load %arg1[%c0] : memref<1xf32, #tpu.memory_space<smem>>
    %c0_0 = arith.constant 0 : index
    %c0_1 = arith.constant 0 : index
    %c0_2 = arith.constant 0 : index
    %1 = vector.load %arg2[%c0_0, %c0_1, %c0_2] : memref<1x4x256xf32, #tpu.memory_space<vmem>>, vector<1x4x256xf32>
    %2 = vector.shape_cast %1 : vector<1x4x256xf32> to vector<4x256xf32>
    %3 = arith.truncf %2 : vector<4x256xf32> to vector<4x256xbf16>
    %cst = arith.constant dense<0.000000e+00> : vector<4x4xf32>
    %4 = tpu.matmul %3, %3, %cst {dimension_numbers = #tpu.dot_dimension_numbers<[1], [1], [0], [0], [0, 0, 1, 0], [], []>} : vector<4x256xbf16>, vector<4x256xbf16>, vector<4x4xf32> -> vector<4x4xf32>
    %cst_3 = arith.constant dense<0x7F800000> : vector<4xf32>
    %5 = vector.multi_reduction <minimumf>, %4, %cst_3 [1] : vector<4x4xf32> to vector<4xf32>
    %6 = vector.shape_cast %5 : vector<4xf32> to vector<4x1xf32>
    %7 = vector.broadcast %6 : vector<4x1xf32> to vector<4x4xf32>
    %8 = arith.subf %7, %4 : vector<4x4xf32>
    %9 = math.exp %8 : vector<4x4xf32>
    %cst_4 = arith.constant dense<0.000000e+00> : vector<4xf32>
    %10 = vector.multi_reduction <add>, %9, %cst_4 [1] : vector<4x4xf32> to vector<4xf32>
    %11 = vector.shape_cast %10 : vector<4xf32> to vector<4x1xf32>
    %12 = vector.broadcast %11 : vector<4x1xf32> to vector<4x4xf32>
    %13 = arith.divf %9, %12 : vector<4x4xf32>
    %14 = arith.truncf %13 : vector<4x4xf32> to vector<4x4xbf16>
    %cst_5 = arith.constant dense<0.000000e+00> : vector<4x256xf32>
    %15 = tpu.matmul %14, %3, %cst_5 {dimension_numbers = #tpu.dot_dimension_numbers<[1], [0], [0], [1], [0, 0, 1, 1], [], []>} : vector<4x4xbf16>, vector<4x256xbf16>, vector<4x256xf32> -> vector<4x256xf32>
    %16 = vector.broadcast %0 : f32 to vector<4x256xf32>
    %17 = arith.mulf %16, %15 : vector<4x256xf32>
    %18 = arith.addf %17, %2 : vector<4x256xf32>
    %c0_6 = arith.constant 0 : index
    %c0_7 = arith.constant 0 : index
    %c0_8 = arith.constant 0 : index
    %19 = vector.load %arg3[%c0_6, %c0_7, %c0_8] : memref<1x4x256xf32, #tpu.memory_space<vmem>>, vector<1x4x256xf32>
    %20 = vector.shape_cast %19 : vector<1x4x256xf32> to vector<4x256xf32>
    %21 = vector.shape_cast %18 : vector<4x256xf32> to vector<1x4x256xf32>
    tpu.vector_store %arg3[%c0_6, %c0_7, %c0_8], %21 {strides = array<i32>} : memref<1x4x256xf32, #tpu.memory_space<vmem>>, vector<1x4x256xf32>,
    return
  }
  func.func @transform_0(%arg0: i32) -> i32 {
    %c0_i32 = arith.constant 0 : i32
    %c0_i32_0 = arith.constant 0 : i32
    return %c0_i32 : i32
  }
  func.func @transform_1(%arg0: i32) -> (i32, i32, i32) {
    %c0_i32 = arith.constant 0 : i32
    %c0_i32_0 = arith.constant 0 : i32
    %c0_i32_1 = arith.constant 0 : i32
    return %arg0, %c0_i32, %c0_i32_0 : i32, i32, i32
  }
  func.func @transform_2(%arg0: i32) -> (i32, i32, i32) {
    %c0_i32 = arith.constant 0 : i32
    %c0_i32_0 = arith.constant 0 : i32
    %c0_i32_1 = arith.constant 0 : i32
    return %arg0, %c0_i32, %c0_i32_0 : i32, i32, i32
  }
}

</mosaic_0001>

<llo_original>
// kernel: tpu_custom_call.1
$region0: #{tpu_custom_call.1}
  #allocation0 [shape = 'u32[]', space=smem, size = 0x4, offset = 0x4, fixed_abs, tag = 'smem constant byte address 0x4 - core index']
  #allocation1 [shape = 'u32[72,128]{1,0:T(1,128)}', space=vmem, size = 0x9000, scoped, tag = 'internal scratch']
  #allocation2 [shape = 'f32[1]{0:T(128)S(6)}', space=smem, size = 0x200, scoped, tag = 'scoped memory for tpu_custom_call.1']
  %s0 = inlined_call_operand.<no memory space> [shape: f32[1], index: 0, kind: input, shape index: {}]
  %s1 = inlined_call_operand.hbm [shape: f32[2,4,256], index: 1, kind: input, shape index: {}]
  %s2 = inlined_call_operand.hbm [shape: f32[2,4,256], index: 2, kind: output, shape index: {}]
  %s3 = sld [smem:[#allocation0]]
  $region45: #{tpu_custom_call.1} parent=0
    _
  %s5 = ssub.s32 1, %s3
  %s6 = scalar_select 0, %s5, %s3
  %7 = sst [smem:[#allocation2]] %s0
  $region1: #{tpu_custom_call.1} parent=0
    #allocation3 [shape = 'u8[8192]{0}', space=vmem, size = 0x2000, scoped, tag = 'input window, operand 1']
    #allocation4 [shape = 's32[2]{0}', space=sflag, size = 0x8, scoped, tag = 'scoped memory for tpu_custom_call.1']
    #allocation5 [shape = 's32[2]{0}', space=sflag, size = 0x8, scoped, tag = 'scoped memory for tpu_custom_call.1']
    #allocation6 [shape = 'u8[8192]{0}', space=vmem, size = 0x2000, scoped, tag = 'output window, operand 0']
    %8 = vsyncpa [#allocation4], 0
    %s9 = scalar_lea.sflag [#allocation4], 1
    %10 = vsyncpa %s9, 0
    %11 = vsyncpa [#allocation5], 0
    %s12 = scalar_lea.sflag [#allocation5], 1
    %13 = vsyncpa %s12, 0
    loop: start=0, step=1, limit=4
    $region2: #{tpu_custom_call.1} parent=1 // loop_pre_header
      _
    $region3: #{tpu_custom_call.1} parent=1 // loop_header
      %s15 = sphi 0, %s19
      %p16 = scmp.ge.s32.totalorder %s15, 4
      %s23 = sphi 0, %s23
      %s25 = sphi 0, %s23
      %s26 = sphi 0, %s25
      %s40 = sphi 0, %s26
      %s46 = sphi 0, %s48
      %s49 = sphi 0, %s46
      %s50 = sphi 0, %s49
      %s66 = sphi 0, %s50
      %s72 = sphi 0, %s74
      %s75 = sphi 0, %s72
      %s76 = sphi 0, %s75
      %s92 = sphi 0, %s76
    $region4: #{tpu_custom_call.1} parent=1 // loop_header_branch
      %18 = sbr.rel (%p16) target = $region8
    $region5: #{tpu_custom_call.1} parent=1 // loop_body
      %s20 = ssub.s32 %s15, 1
      %s21 = ssub.s32 %s15, 2
      %s22 = sadd.s32 %s15, 1
      %s24 = sadd.s32 %s23, 1
      %p27 = scmp.eq.s32.totalorder %s15, 1
      %p28 = scmp.ne.s32.totalorder %s23, %s25
      %p29 = scmp.eq.s32.totalorder %s15, 0
      %p30 = por %p28, %p29
      %p31 = scmp.ne.s32.totalorder %s23, %s25
      %p32 = scmp.eq.s32.totalorder %s20, 1
      %p33 = por %p31, %p32
      %p34 = scmp.ne.s32.totalorder %s25, %s26
      %p35 = scmp.eq.s32.totalorder %s20, 0
      %p36 = por %p34, %p35
      %p37 = scmp.ne.s32.totalorder %s25, %s26
      %p38 = scmp.eq.s32.totalorder %s21, 1
      %p39 = por %p37, %p38
      %p41 = scmp.ne.s32.totalorder %s26, %s40
      %p42 = scmp.eq.s32.totalorder %s21, 0
      %p43 = por %p41, %p42
      %s44 = ssub.s32 %s15, %s22
      %p45 = scmp.eq.s32.totalorder %s44, 0
      %s47 = sadd.s32 %s46, 1
      %s48 = scalar_select %p45, %s46, %s47
      %p51 = pneg %p45
      %p52 = scmp.eq.s32.totalorder %s15, 1
      %p53 = por %p51, %p52
      %p54 = scmp.ne.s32.totalorder %s46, %s49
      %p55 = scmp.eq.s32.totalorder %s15, 0
      %p56 = por %p54, %p55
      %p57 = scmp.ne.s32.totalorder %s46, %s49
      %p58 = scmp.eq.s32.totalorder %s20, 1
      %p59 = por %p57, %p58
      %p60 = scmp.ne.s32.totalorder %s49, %s50
      %p61 = scmp.eq.s32.totalorder %s20, 0
      %p62 = por %p60, %p61
      %p63 = scmp.ne.s32.totalorder %s49, %s50
      %p64 = scmp.eq.s32.totalorder %s21, 1
      %p65 = por %p63, %p64
      %p67 = scmp.ne.s32.totalorder %s50, %s66
      %p68 = scmp.eq.s32.totalorder %s21, 0
      %p69 = por %p67, %p68
      %s70 = ssub.s32 %s15, %s22
      %p71 = scmp.eq.s32.totalorder %s70, 0
      %s73 = sadd.s32 %s72, 1
      %s74 = scalar_select %p71, %s72, %s73
      %p77 = pneg %p71
      %p78 = scmp.eq.s32.totalorder %s15, 1
      %p79 = por %p77, %p78
      %p80 = scmp.ne.s32.totalorder %s72, %s75
      %p81 = scmp.eq.s32.totalorder %s15, 0
      %p82 = por %p80, %p81
      %p83 = scmp.ne.s32.totalorder %s72, %s75
      %p84 = scmp.eq.s32.totalorder %s20, 1
      %p85 = por %p83, %p84
      %p86 = scmp.ne.s32.totalorder %s75, %s76
      %p87 = scmp.eq.s32.totalorder %s20, 0
      %p88 = por %p86, %p87
      %p89 = scmp.ne.s32.totalorder %s75, %s76
      %p90 = scmp.eq.s32.totalorder %s21, 1
      %p91 = por %p89, %p90
      %p93 = scmp.ne.s32.totalorder %s76, %s92
      %p94 = scmp.eq.s32.totalorder %s21, 0
      %p95 = por %p93, %p94
      %p96 = scmp.le.s32.totalorder 1, %s15
      %p97 = scmp.lt.s32.totalorder %s15, 3
      %p98 = pnand %p96, %p97
      %p99 = pneg %p98
      // Predicated region
      $region9: #{tpu_custom_call.1} parent=5 // pred_check
        _
      $region10: #{tpu_custom_call.1} parent=5 // pred_check_branch
        %101 = sbr.rel (%p98) target = $region12
      $region11: #{tpu_custom_call.1} parent=5 // pred_region
        %s102 = ssub.s32 %s15, 1
        // Predicated region
        $region13: #{tpu_custom_call.1} parent=11 // pred_check
          %p103 = pneg %p36
        $region14: #{tpu_custom_call.1} parent=11 // pred_check_branch
          %105 = sbr.rel (%p103) target = $region16
        $region15: #{tpu_custom_call.1} parent=11 // pred_region
          _
        $region16: #{tpu_custom_call.1} parent=11 // pred_fallthru
          _
      $region12: #{tpu_custom_call.1} parent=5 // pred_fallthru
        _
      %p106 = scmp.lt.s32.totalorder %s15, 2
      // Predicated region
      $region17: #{tpu_custom_call.1} parent=5 // pred_check
        %p107 = pneg %p106
      $region18: #{tpu_custom_call.1} parent=5 // pred_check_branch
        %109 = sbr.rel (%p107) target = $region20
      $region19: #{tpu_custom_call.1} parent=5 // pred_region
        // Predicated region
        $region21: #{tpu_custom_call.1} parent=19 // pred_check
          %p110 = pneg %p56
        $region22: #{tpu_custom_call.1} parent=19 // pred_check_branch
          %112 = sbr.rel (%p110) target = $region24
        $region23: #{tpu_custom_call.1} parent=19 // pred_region
          %s113 = sand.u32 %s46, 1
          %s114 = scalar_lea.sflag [#allocation4], %s113
          %s115 = sand.u32 %s46, 1
          %s116 = smul.addr %s115, 8
          %s117 = scalar_lea.vmem [#allocation3], %s116
          %119 = vsyncadd %s114, 0
          %s120 = smul.addr %s15, 2
          %s121 = smul.addr %s120, 4
          %s122 = scalar_lea.hbm %s1, %s121
          %s124 = sshll.u32 %s122, 4
          %s125 = int_to_ptr.hbm [resolvable:$true] %s124
          %s126 = sshll.u32 %s117, 4
          %s127 = int_to_ptr.vmem [resolvable:$true] %s126
          %129 = dma.hbm_to_vmem [thread:$0]  %s125, 128, %s127, %s114
        $region24: #{tpu_custom_call.1} parent=19 // pred_fallthru
          _
      $region20: #{tpu_custom_call.1} parent=5 // pred_fallthru
        _
      %p130 = scmp.le.s32.totalorder 1, %s15
      %p131 = scmp.lt.s32.totalorder %s15, 3
      %p132 = pnand %p130, %p131
      %p133 = pneg %p132
      // Predicated region
      $region25: #{tpu_custom_call.1} parent=5 // pred_check
        _
      $region26: #{tpu_custom_call.1} parent=5 // pred_check_branch
        %135 = sbr.rel (%p132) target = $region28
      $region27: #{tpu_custom_call.1} parent=5 // pred_region
        %s136 = ssub.s32 %s15, 1
        %s137 = sand.u32 %s49, 1
        %s138 = scalar_lea.sflag [#allocation4], %s137
        %s139 = sand.u32 %s49, 1
        %s140 = smul.addr %s139, 8
        %s141 = scalar_lea.vmem [#allocation3], %s140
        // Predicated region
        $region29: #{tpu_custom_call.1} parent=27 // pred_check
          %p142 = pneg %p62
        $region30: #{tpu_custom_call.1} parent=27 // pred_check_branch
          %144 = sbr.rel (%p142) target = $region32
        $region31: #{tpu_custom_call.1} parent=27 // pred_region
          %146 = dma.done %s138, 128
        $region32: #{tpu_custom_call.1} parent=27 // pred_fallthru
          _
        %p147 = pneg %p36
        %p148 = pneg %p33
        %s149 = sand.u32 %s49, 1
        %s150 = scalar_lea.sflag [#allocation4], %s149
        %s151 = sand.u32 %s49, 1
        %s152 = smul.addr %s151, 8
        %s153 = scalar_lea.vmem [#allocation3], %s152
        %p154 = pneg %p62
        %p155 = pneg %p59
        %p156 = pneg %p88
        %p157 = pneg %p85
        %s158 = sand.u32 %s75, 1
        %s159 = scalar_lea.sflag [#allocation5], %s158
        %s160 = sand.u32 %s75, 1
        %s161 = smul.addr %s160, 8
        %s162 = scalar_lea.vmem [#allocation6], %s161
        %s164 = sld [smem:[#allocation2]]
        %v165 = vld [vmem:[%s141] sm:$0xff]
        %167 = vst [vmem:[#allocation1] ss:$2 sm:$0xff] %v165
        %v168 = vld.sshfl [vmem:[#allocation1] sm:$0xff pattern:$0x75316420]
        %v169 = vld.sshfl [vmem:[#allocation1 + $0x8] sm:$0xff pattern:$0x75316420]
        %v172 = vpack.c.bf16 %v168, %v168
        %v173 = vpack.c.bf16 %v169, %v169
        %174 = vmatpush.bf16.xpose.msra.mxu0 0
        %175 = vmatpush.bf16.xpose.msra.mxu0 0
        %176 = vmatpush.bf16.xpose.msra.mxu0 0
        %177 = vmatpush.bf16.xpose.msra.mxu0 0
        %178 = vmatpush.bf16.xpose.msra.mxu0 0
        %179 = vmatpush.bf16.xpose.msra.mxu0 0
        %180 = vmatpush.bf16.xpose.msra.mxu0 0
        %181 = vmatpush.bf16.xpose.msra.mxu0 %v172
        %182 = vmatmul.bf16.gmra.mxu0 %v172
        %v183 = vpop.f32.mrf.mxu0
        %v184 = vadd.f32 0.0, %v183
        %v185 = vpop.f32.mrf.mxu0
        %186 = vdwg.mxu0
        %187 = vmatpush.bf16.xpose.msra.mxu0 0
        %188 = vmatpush.bf16.xpose.msra.mxu0 0
        %189 = vmatpush.bf16.xpose.msra.mxu0 0
        %190 = vmatpush.bf16.xpose.msra.mxu0 0
        %191 = vmatpush.bf16.xpose.msra.mxu0 0
        %192 = vmatpush.bf16.xpose.msra.mxu0 0
        %193 = vmatpush.bf16.xpose.msra.mxu0 0
        %194 = vmatpush.bf16.xpose.msra.mxu0 %v173
        %195 = vmatmul.bf16.gmra.mxu0 %v173
        %v196 = vpop.f32.mrf.mxu0
        %v197 = vadd.f32 %v184, %v196
        %v198 = vpop.f32.mrf.mxu0
        %199 = vdwg.mxu0
        %vm200 = vcmask 27648
        %v201 = vsel %vm200, %v197, inf
        %202 = vmin.xlane.f32.xlu0 %v201
        %v203 = vpop.xlane.xlu0 %202
        %v204 = vsub.f32 %v203, %v197
        %v205 = vmul.f32 %v204, 1.442695
        %v206 = vpow.pop %v205
        %v207 = vsel %vm200, %v206, 0.0
        %208 = vadd.xlane.f32.xlu0 %v207
        %v209 = vpop.xlane.xlu0 %208
        %v210 = vrcp.pop %v209
        %v211 = vmul.f32 %v209, %v210
        %v212 = vsub.f32 1.0, %v211
        %v213 = vmul.f32 %v210, %v212
        %v214 = vadd.f32 %v210, %v213
        %vm215 = vweird.f32 %v209
        %vm216 = vweird.f32 %v210
        %vm217 = vmor %vm215, %vm216
        %v218 = vsel %vm217, %v210, %v214
        %v219 = vand.u32 2147483647, %v209
        %vm220 = vcmp.eq.f32.partialorder %v219, 8.507059e+37
        %v221 = vand.u32 %v209, 2147483648
        %v222 = vor.u32 1.1754944e-38, %v221
        %v223 = vsel %vm220, %v222, %v218
        %v224 = vmul.f32 %v206, %v223
        %v225 = vpack.c.bf16 %v224, %v224
        %vm226 = vcmask 31744
        %v228 = vsel %vm226, %v225, 0
        %vm230 = vcmask 1041408
        %v232 = vsel %vm230, %v172, 0
        %v235 = vsel %vm230, %v173, 0
        %237 = vmatpush.bf16.msra.mxu0 0
        %238 = vmatpush.bf16.msra.mxu0 0
        %239 = vmatpush.bf16.msra.mxu0 0
        %240 = vmatpush.bf16.msra.mxu0 0
        %241 = vmatpush.bf16.msra.mxu0 0
        %242 = vmatpush.bf16.msra.mxu0 0
        %243 = vmatpush.bf16.msra.mxu0 0
        %244 = vmatpush.bf16.msra.mxu0 %v232
        %245 = vmatmul.bf16.gmra.mxu0 %v228
        %v246 = vpop.f32.mrf.mxu0
        %v247 = vadd.f32 0.0, %v246
        %v248 = vpop.f32.mrf.mxu0
        %249 = vdwg.mxu0
        %250 = vmatpush.bf16.msra.mxu0 0
        %251 = vmatpush.bf16.msra.mxu0 0
        %252 = vmatpush.bf16.msra.mxu0 0
        %253 = vmatpush.bf16.msra.mxu0 0
        %254 = vmatpush.bf16.msra.mxu0 0
        %255 = vmatpush.bf16.msra.mxu0 0
        %256 = vmatpush.bf16.msra.mxu0 0
        %257 = vmatpush.bf16.msra.mxu0 %v235
        %258 = vmatmul.bf16.gmra.mxu0 %v228
        %v259 = vpop.f32.mrf.mxu0
        %v260 = vadd.f32 0.0, %v259
        %v261 = vpop.f32.mrf.mxu0
        %262 = vdwg.mxu0
        %v263 = vstv %s164
        %v264 = vmul.f32 %v263, %v247
        %v265 = vmul.f32 %v263, %v260
        %266 = vst [vmem:[#allocation1] ss:$2 sm:$0xff] %v165
        %v267 = vld.sshfl [vmem:[#allocation1] sm:$0xff pattern:$0x75316420]
        %v268 = vld.sshfl [vmem:[#allocation1 + $0x8] sm:$0xff pattern:$0x75316420]
        %v271 = vadd.f32 %v264, %v267
        %v272 = vadd.f32 %v265, %v268
        %v275 = vrot.slane %v272, 4
        %vm276 = vcmask 1043456
        %v277 = vsel %vm276, %v271, %v275
        %279 = vst [vmem:[%s162] sm:$0xff] %v277
        %s280 = sand.u32 %s75, 1
        %s281 = scalar_lea.sflag [#allocation5], %s280
        %s282 = sand.u32 %s75, 1
        %s283 = smul.addr %s282, 8
        %s284 = scalar_lea.vmem [#allocation6], %s283
        // Predicated region
        $region33: #{tpu_custom_call.1} parent=27 // pred_check
          %p285 = pneg %p85
        $region34: #{tpu_custom_call.1} parent=27 // pred_check_branch
          %287 = sbr.rel (%p285) target = $region36
        $region35: #{tpu_custom_call.1} parent=27 // pred_region
          %289 = vsyncadd %s281, 0
          %s290 = smul.addr %s20, 2
          %s291 = smul.addr %s290, 4
          %s292 = scalar_lea.hbm %s2, %s291
          %s294 = sshll.u32 %s284, 4
          %s295 = int_to_ptr.vmem [resolvable:$true] %s294
          %s296 = sshll.u32 %s292, 4
          %s297 = int_to_ptr.hbm [resolvable:$true] %s296
          %299 = dma.vmem_to_hbm [thread:$0]  %s295, 128, %s297, %s281
        $region36: #{tpu_custom_call.1} parent=27 // pred_fallthru
          _
      $region28: #{tpu_custom_call.1} parent=5 // pred_fallthru
        _
      %p300 = scmp.le.s32.totalorder 2, %s15
      // Predicated region
      $region37: #{tpu_custom_call.1} parent=5 // pred_check
        %p301 = pneg %p300
      $region38: #{tpu_custom_call.1} parent=5 // pred_check_branch
        %303 = sbr.rel (%p301) target = $region40
      $region39: #{tpu_custom_call.1} parent=5 // pred_region
        %s304 = ssub.s32 %s15, 2
        // Predicated region
        $region41: #{tpu_custom_call.1} parent=39 // pred_check
          %p305 = pneg %p91
        $region42: #{tpu_custom_call.1} parent=39 // pred_check_branch
          %307 = sbr.rel (%p305) target = $region44
        $region43: #{tpu_custom_call.1} parent=39 // pred_region
          %s308 = sand.u32 %s76, 1
          %s309 = scalar_lea.sflag [#allocation5], %s308
          %s310 = sand.u32 %s76, 1
          %s311 = smul.addr %s310, 8
          %s312 = scalar_lea.vmem [#allocation6], %s311
          %314 = dma.done %s309, 128
        $region44: #{tpu_custom_call.1} parent=39 // pred_fallthru
          _
      $region40: #{tpu_custom_call.1} parent=5 // pred_fallthru
        _
    $region6: #{tpu_custom_call.1} parent=1 // loop_footer
      %s19 = sadd.s32 1, %s15
    $region7: #{tpu_custom_call.1} parent=1 // loop_footer_branch
      %14 = sbr.rel target = $region3
    $region8: #{tpu_custom_call.1} parent=1 // loop_exit
      _
    %315 = vsyncpa [#allocation4], 1
    %s316 = scalar_lea.sflag [#allocation4], 1
    %317 = vsyncpa %s316, 1
    %318 = vsyncpa [#allocation5], 1
    %s319 = scalar_lea.sflag [#allocation5], 1
    %320 = vsyncpa %s319, 1

</llo_original>
